<compile_context>
chip_gen: v5e
topology: v5e:2x2
jax: 0.10.0
libtpu: 0.0.40
codegen_flags: <defaults>
</compile_context>

<pallas_src>
import jax
import jax.numpy as jnp
from jax.experimental import pallas as pl
from jax.experimental.pallas import tpu as pltpu


def _round_up(x: int, m: int) -> int:
    return ((x + m - 1) // m) * m


def _fc_prelu_single_k_kernel(alpha_ref, x_ref, w_ref, b_ref, o_ref):
    """One (tm, tn) output tile; full K in a single block (no scratch)."""
    y = jnp.dot(x_ref[...], w_ref[...], preferred_element_type=jnp.float32)
    y = y + b_ref[...]                      # bias broadcast over rows
    alpha = alpha_ref[0, 0]                 # shared PReLU slope (SMEM scalar)
    o_ref[...] = jnp.where(y > 0, y, alpha * y).astype(o_ref.dtype)


def _fc_prelu_kernel(alpha_ref, x_ref, w_ref, b_ref, o_ref, acc_ref):
    """One (tm, tn) output tile; K reduced along grid axis 2."""
    k = pl.program_id(2)
    nk = pl.num_programs(2)

    partial = jnp.dot(x_ref[...], w_ref[...], preferred_element_type=jnp.float32)

    @pl.when(k == 0)
    def _init():
        # Fuse the bias add into the accumulator init.
        acc_ref[...] = jnp.broadcast_to(
            b_ref[...].astype(jnp.float32), acc_ref.shape)

    @pl.when(k < nk - 1)
    def _accumulate():
        acc_ref[...] += partial

    @pl.when(k == nk - 1)
    def _finalize():
        # Consume the last partial in-register; avoids a store+reload of acc.
        y = acc_ref[...] + partial
        alpha = alpha_ref[0, 0]
        o_ref[...] = jnp.where(y > 0, y, alpha * y).astype(o_ref.dtype)


def fc_forward(x, weight_t, bias, alpha, *, tm=256, tn=256, tk=512):
    """x: (B, in_dim); weight_t: (in_dim, out_dim); bias: (out_dim,);
    alpha: scalar. Returns (B, out_dim) with PReLU applied."""
    B, K = x.shape
    K2, N = weight_t.shape
    assert K == K2, "weight_t must be (in_dim, out_dim)"

    # Clamp tile sizes to the (padded) problem size; keep lane dims 128-aligned
    # and the sublane dim 8-aligned. Tiles fit well within the scoped VMEM
    # limit on v5e/v6e/v7x even with the deeper weight buffering.
    tm = min(tm, _round_up(B, 8))
    tn = min(tn, _round_up(N, 128))
    tk = min(tk, _round_up(K, 128))

    Bp = _round_up(B, tm)
    Kp = _round_up(K, tk)
    Np = _round_up(N, tn)

    # Zero-pad to tile multiples (zero K-padding contributes 0 to the matmul;
    # padded output rows/columns are sliced away below).
    x_p = x if (Bp == B and Kp == K) else jnp.pad(x, ((0, Bp - B), (0, Kp - K)))
    w_p = (weight_t if (Kp == K and Np == N)
           else jnp.pad(weight_t, ((0, Kp - K), (0, Np - N))))
    b_p = bias if Np == N else jnp.pad(bias, (0, Np - N))
    b_p = b_p.reshape(1, Np)
    alpha_smem = jnp.asarray(alpha, jnp.float32).reshape(1, 1)

    grid_m = Bp // tm
    grid_n = Np // tn
    grid_k = Kp // tk

    cost = pl.CostEstimate(
        flops=2 * B * K * N,
        transcendentals=0,
        bytes_accessed=4 * (B * K + K * N + N + B * N),
    )

    common_compiler_kwargs = dict(vmem_limit_bytes=32 * 1024 * 1024)

    if grid_k == 1:
        # Fast path: whole K fits in one block -> fully fused, no scratch.
        out_padded = pl.pallas_call(
            _fc_prelu_single_k_kernel,
            out_shape=jax.ShapeDtypeStruct((Bp, Np), x.dtype),
            grid_spec=pltpu.PrefetchScalarGridSpec(
                num_scalar_prefetch=0,
                grid=(grid_m, grid_n),
                in_specs=[
                    pl.BlockSpec(memory_space=pltpu.MemorySpace.SMEM),
                    pl.BlockSpec((tm, Kp), lambda i, j: (i, 0)),
                    pl.BlockSpec((Kp, tn), lambda i, j: (0, j)),
                    pl.BlockSpec((1, tn), lambda i, j: (0, j)),
                ],
                out_specs=pl.BlockSpec((tm, tn), lambda i, j: (i, j)),
            ),
            compiler_params=pltpu.CompilerParams(
                dimension_semantics=("parallel", "parallel"),
                **common_compiler_kwargs,
            ),
            cost_estimate=cost,
        )(alpha_smem, x_p, w_p, b_p)
    else:
        out_padded = pl.pallas_call(
            _fc_prelu_kernel,
            out_shape=jax.ShapeDtypeStruct((Bp, Np), x.dtype),
            grid_spec=pltpu.PrefetchScalarGridSpec(
                num_scalar_prefetch=0,
                grid=(grid_m, grid_n, grid_k),
                in_specs=[
                    # shared PReLU slope: untiled scalar in SMEM
                    pl.BlockSpec(memory_space=pltpu.MemorySpace.SMEM),
                    # activation tile (tm, tk), walks K with grid axis 2
                    pl.BlockSpec((tm, tk), lambda i, j, k: (i, k)),
                    # weight tile (tk, tn), 3-deep buffering to hide weight DMA
                    pl.BlockSpec((tk, tn), lambda i, j, k: (k, j),
                                 pipeline_mode=pl.Buffered(3)),
                    # bias tile (1, tn), indexed by output-column tile only
                    pl.BlockSpec((1, tn), lambda i, j, k: (0, j)),
                ],
                out_specs=pl.BlockSpec((tm, tn), lambda i, j, k: (i, j)),
                scratch_shapes=[pltpu.VMEM((tm, tn), jnp.float32)],
            ),
            compiler_params=pltpu.CompilerParams(
                dimension_semantics=("parallel", "parallel", "arbitrary"),
                **common_compiler_kwargs,
            ),
            cost_estimate=cost,
        )(alpha_smem, x_p, w_p, b_p)

    return out_padded[:B, :N]


if __name__ == "__main__":
    def ref_fc(x, weight_t, bias, alpha):
        y = x @ weight_t + bias[None, :]
        return jnp.where(y > 0, y, alpha * y)

    key = jax.random.PRNGKey(0)
    alpha = jnp.float32(0.25)  # nn.PReLU() default init

    # --- Case 1: small shape consistent with the FC module (8, 32->64) -----
    B, in_dim, out_dim = 8, 32, 64
    k1, k2, k3, key = jax.random.split(key, 4)
    x = jax.random.normal(k1, (B, in_dim), jnp.float32)
    bound = 1.0 / jnp.sqrt(jnp.float32(in_dim))
    weight = jax.random.uniform(k2, (out_dim, in_dim), jnp.float32, -bound, bound)
    bias = jax.random.uniform(k3, (out_dim,), jnp.float32, -bound, bound)
    weight_t = weight.T  # stored pre-transposed ONCE, not per call

    out = jax.block_until_ready(fc_forward(x, weight_t, bias, alpha))
    ref = ref_fc(x, weight_t, bias, alpha)
    assert out.shape == (B, out_dim)
    assert jnp.allclose(out, ref, atol=1e-4, rtol=1e-4)

    # --- Case 2: exercise the tiled K reduction + multiple N tiles ---------
    B2, in2, out2 = 16, 384, 256
    k1, k2, k3, key = jax.random.split(key, 4)
    x2 = jax.random.normal(k1, (B2, in2), jnp.float32)
    bound2 = 1.0 / jnp.sqrt(jnp.float32(in2))
    w2 = jax.random.uniform(k2, (out2, in2), jnp.float32, -bound2, bound2)
    b2 = jax.random.uniform(k3, (out2,), jnp.float32, -bound2, bound2)
    w2t = w2.T

    out2_arr = jax.block_until_ready(
        fc_forward(x2, w2t, b2, alpha, tm=128, tn=128, tk=128))
    ref2 = ref_fc(x2, w2t, b2, alpha)
    assert out2_arr.shape == (B2, out2)
    assert jnp.allclose(out2_arr, ref2, atol=1e-3, rtol=1e-3)

    print("KERNEL_OK")
</pallas_src>

<mosaic_0001>
module attributes {stable_mosaic.version = 11 : i64} {
  func.func @_fc_prelu_single_k_kernel(%arg0: i32, %arg1: i32, %arg2: memref<1x1xf32, #tpu.memory_space<smem>>, %arg3: memref<8x128xf32, #tpu.memory_space<vmem>>, %arg4: memref<128x128xf32, #tpu.memory_space<vmem>>, %arg5: memref<1x128xf32, #tpu.memory_space<vmem>>, %arg6: memref<8x128xf32, #tpu.memory_space<vmem>>) attributes {dimension_semantics = [#tpu.dimension_semantics<parallel>, #tpu.dimension_semantics<parallel>], iteration_bounds = array<i64: 1, 1>, scalar_prefetch = 0 : i64, scratch_operands = 0 : i64, tpu.core_type = #tpu.core_type<tc>, window_params = [{transform_indices = @transform_0, window_bounds = array<i64: 1, 1>}, {transform_indices = @transform_1, window_bounds = array<i64: 8, 128>}, {transform_indices = @transform_2, window_bounds = array<i64: 128, 128>}, {transform_indices = @transform_3, window_bounds = array<i64: 1, 128>}, {transform_indices = @transform_4, window_bounds = array<i64: 8, 128>}]} {
    %c0 = arith.constant 0 : index
    %c0_0 = arith.constant 0 : index
    %0 = vector.load %arg3[%c0, %c0_0] : memref<8x128xf32, #tpu.memory_space<vmem>>, vector<8x128xf32>
    %c0_1 = arith.constant 0 : index
    %c0_2 = arith.constant 0 : index
    %1 = vector.load %arg4[%c0_1, %c0_2] : memref<128x128xf32, #tpu.memory_space<vmem>>, vector<128x128xf32>
    %cst = arith.constant dense<0.000000e+00> : vector<8x128xf32>
    %2 = tpu.matmul %0, %1, %cst {dimension_numbers = #tpu.dot_dimension_numbers<[1], [0], [0], [1], [0, 0, 1, 1], [], []>} : vector<8x128xf32>, vector<128x128xf32>, vector<8x128xf32> -> vector<8x128xf32>
    %c0_3 = arith.constant 0 : index
    %c0_4 = arith.constant 0 : index
    %3 = vector.load %arg5[%c0_3, %c0_4] : memref<1x128xf32, #tpu.memory_space<vmem>>, vector<1x128xf32>
    %4 = vector.broadcast %3 : vector<1x128xf32> to vector<8x128xf32>
    %5 = arith.addf %2, %4 : vector<8x128xf32>
    %c0_5 = arith.constant 0 : index
    %c0_6 = arith.constant 0 : index
    %6 = memref.load %arg2[%c0_5, %c0_6] : memref<1x1xf32, #tpu.memory_space<smem>>
    %cst_7 = arith.constant 0.000000e+00 : f32
    %7 = vector.broadcast %cst_7 : f32 to vector<8x128xf32>
    %8 = arith.cmpf ogt, %5, %7 : vector<8x128xf32>
    %9 = vector.broadcast %6 : f32 to vector<8x128xf32>
    %10 = arith.mulf %9, %5 : vector<8x128xf32>
    %11 = arith.select %8, %5, %10 : vector<8x128xi1>, vector<8x128xf32>
    %c0_8 = arith.constant 0 : index
    %c0_9 = arith.constant 0 : index
    %12 = vector.load %arg6[%c0_8, %c0_9] : memref<8x128xf32, #tpu.memory_space<vmem>>, vector<8x128xf32>
    tpu.vector_store %arg6[%c0_8, %c0_9], %11 {strides = array<i32>} : memref<8x128xf32, #tpu.memory_space<vmem>>, vector<8x128xf32>,
    return
  }
  func.func @transform_0(%arg0: i32, %arg1: i32) -> (i32, i32) {
    %c0_i32 = arith.constant 0 : i32
    %c0_i32_0 = arith.constant 0 : i32
    %c0_i32_1 = arith.constant 0 : i32
    return %c0_i32, %c0_i32_0 : i32, i32
  }
  func.func @transform_1(%arg0: i32, %arg1: i32) -> (i32, i32) {
    %c0_i32 = arith.constant 0 : i32
    %c0_i32_0 = arith.constant 0 : i32
    return %arg0, %c0_i32 : i32, i32
  }
  func.func @transform_2(%arg0: i32, %arg1: i32) -> (i32, i32) {
    %c0_i32 = arith.constant 0 : i32
    %c0_i32_0 = arith.constant 0 : i32
    return %c0_i32, %arg1 : i32, i32
  }
  func.func @transform_3(%arg0: i32, %arg1: i32) -> (i32, i32) {
    %c0_i32 = arith.constant 0 : i32
    %c0_i32_0 = arith.constant 0 : i32
    return %c0_i32, %arg1 : i32, i32
  }
  func.func @transform_4(%arg0: i32, %arg1: i32) -> (i32, i32) {
    %c0_i32 = arith.constant 0 : i32
    return %arg0, %arg1 : i32, i32
  }
}

</mosaic_0001>

<llo_original>
// kernel: tpu_custom_call.1
$region0: #{tpu_custom_call.1}
  #allocation0 [shape = 'u32[]', space=smem, size = 0x4, offset = 0x4, fixed_abs, tag = 'smem constant byte address 0x4 - core index']
  #allocation1 [shape = 'u32[72,128]{1,0:T(1,128)}', space=vmem, size = 0x9000, scoped, tag = 'internal scratch']
  #allocation2 [shape = 'f32[1,1]{1,0:T(1,128)S(6)}', space=smem, size = 0x200, scoped, tag = 'scoped memory for tpu_custom_call.1']
  %s0 = inlined_call_operand.<no memory space> [shape: f32[1,1], index: 0, kind: input, shape index: {}]
  %s1 = inlined_call_operand.hbm [shape: f32[8,128], index: 1, kind: input, shape index: {}]
  %s2 = inlined_call_operand.hbm [shape: f32[128,128], index: 2, kind: input, shape index: {}]
  %s3 = inlined_call_operand.vmem [shape: f32[1,128], index: 3, kind: input, shape index: {}]
  %s4 = inlined_call_operand.hbm [shape: f32[8,128], index: 4, kind: output, shape index: {}]
  %s5 = sld [smem:[#allocation0]]
  $region34: #{tpu_custom_call.1} parent=0
    _
  %s7 = ssub.s32 1, %s5
  %s8 = scalar_select 0, %s7, %s5
  %9 = sst [smem:[#allocation2]] %s0
  $region1: #{tpu_custom_call.1} parent=0
    #allocation3 [shape = 'u8[4096]{0}', space=vmem, size = 0x1000, scoped, tag = 'input window, operand 1, single buffered']
    #allocation4 [shape = 's32[1]{0}', space=sflag, size = 0x4, scoped, tag = 'scoped memory for tpu_custom_call.1']
    #allocation5 [shape = 's32[1]{0}', space=sflag, size = 0x4, scoped, tag = 'scoped memory for tpu_custom_call.1']
    #allocation6 [shape = 'u8[65536]{0}', space=vmem, size = 0x10000, scoped, tag = 'input window, operand 2, single buffered']
    #allocation7 [shape = 's32[1]{0}', space=sflag, size = 0x4, scoped, tag = 'scoped memory for tpu_custom_call.1']
    #allocation8 [shape = 'u8[4096]{0}', space=vmem, size = 0x1000, scoped, tag = 'output window, operand 0, single buffered']
    %10 = vsyncpa [#allocation4], 0
    %11 = vsyncpa [#allocation7], 0
    %12 = vsyncpa [#allocation5], 0
    // Predicated region
    $region2: #{tpu_custom_call.1} parent=1 // pred_check
      _
    $region3: #{tpu_custom_call.1} parent=1 // pred_check_branch
      %14 = sbr.rel (0) target = $region5
    $region4: #{tpu_custom_call.1} parent=1 // pred_region
      _
    $region5: #{tpu_custom_call.1} parent=1 // pred_fallthru
      _
    // Predicated region
    $region6: #{tpu_custom_call.1} parent=1 // pred_check
      _
    $region7: #{tpu_custom_call.1} parent=1 // pred_check_branch
      %16 = sbr.rel (0) target = $region9
    $region8: #{tpu_custom_call.1} parent=1 // pred_region
      %18 = vsyncadd [#allocation4], 0
      %s20 = sshll.u32 %s1, 4
      %s21 = int_to_ptr.hbm [resolvable:$true] %s20
      %s22 = sshll.u32 [#allocation3], 4
      %s23 = int_to_ptr.vmem [resolvable:$true] %s22
      %25 = dma.hbm_to_vmem [thread:$0]  %s21, 128, %s23, [#allocation4]
    $region9: #{tpu_custom_call.1} parent=1 // pred_fallthru
      _
    // Predicated region
    $region10: #{tpu_custom_call.1} parent=1 // pred_check
      _
    $region11: #{tpu_custom_call.1} parent=1 // pred_check_branch
      %27 = sbr.rel (0) target = $region13
    $region12: #{tpu_custom_call.1} parent=1 // pred_region
      %29 = vsyncadd [#allocation7], 0
      %s30 = sshll.u32 %s2, 4
      %s31 = int_to_ptr.hbm [resolvable:$true] %s30
      %s32 = sshll.u32 [#allocation6], 4
      %s33 = int_to_ptr.vmem [resolvable:$true] %s32
      %38 = dma.hbm_to_vmem [thread:$0]  %s31, 2048, %s33, [#allocation7], 128, 128, 8
    $region13: #{tpu_custom_call.1} parent=1 // pred_fallthru
      _
    // Predicated region
    $region14: #{tpu_custom_call.1} parent=1 // pred_check
      _
    $region15: #{tpu_custom_call.1} parent=1 // pred_check_branch
      %40 = sbr.rel (0) target = $region17
    $region16: #{tpu_custom_call.1} parent=1 // pred_region
      _
    $region17: #{tpu_custom_call.1} parent=1 // pred_fallthru
      _
    // Predicated region
    $region18: #{tpu_custom_call.1} parent=1 // pred_check
      _
    $region19: #{tpu_custom_call.1} parent=1 // pred_check_branch
      %42 = sbr.rel (0) target = $region21
    $region20: #{tpu_custom_call.1} parent=1 // pred_region
      %44 = dma.done [#allocation4], 128
    $region21: #{tpu_custom_call.1} parent=1 // pred_fallthru
      _
    // Predicated region
    $region22: #{tpu_custom_call.1} parent=1 // pred_check
      _
    $region23: #{tpu_custom_call.1} parent=1 // pred_check_branch
      %46 = sbr.rel (0) target = $region25
    $region24: #{tpu_custom_call.1} parent=1 // pred_region
      %48 = dma.done [#allocation7], 2048
    $region25: #{tpu_custom_call.1} parent=1 // pred_fallthru
      _
    %v49 = vld [vmem:[#allocation3] sm:$0xff]
    %v50 = vld [vmem:[#allocation6] sm:$0xff]
    %v51 = vld [vmem:[#allocation6 + $0x8] sm:$0xff]
    %v52 = vld [vmem:[#allocation6 + $0x10] sm:$0xff]
    %v53 = vld [vmem:[#allocation6 + $0x18] sm:$0xff]
    %v54 = vld [vmem:[#allocation6 + $0x20] sm:$0xff]
    %v55 = vld [vmem:[#allocation6 + $0x28] sm:$0xff]
    %v56 = vld [vmem:[#allocation6 + $0x30] sm:$0xff]
    %v57 = vld [vmem:[#allocation6 + $0x38] sm:$0xff]
    %v58 = vld [vmem:[#allocation6 + $0x40] sm:$0xff]
    %v59 = vld [vmem:[#allocation6 + $0x48] sm:$0xff]
    %v60 = vld [vmem:[#allocation6 + $0x50] sm:$0xff]
    %v61 = vld [vmem:[#allocation6 + $0x58] sm:$0xff]
    %v62 = vld [vmem:[#allocation6 + $0x60] sm:$0xff]
    %v63 = vld [vmem:[#allocation6 + $0x68] sm:$0xff]
    %v64 = vld [vmem:[#allocation6 + $0x70] sm:$0xff]
    %v65 = vld [vmem:[#allocation6 + $0x78] sm:$0xff]
    %v66 = vld [vmem:[%s3] sm:$0x1]
    %v68 = vperm.slane %v66, 0
    %70 = vmatpush.msra.mxu0 %v65
    %71 = vmatpush.msra.mxu0 %v64
    %72 = vmatpush.msra.mxu0 %v63
    %73 = vmatpush.msra.mxu0 %v62
    %74 = vmatpush.msra.mxu0 %v61
    %75 = vmatpush.msra.mxu0 %v60
    %76 = vmatpush.msra.mxu0 %v59
    %77 = vmatpush.msra.mxu0 %v58
    %78 = vmatpush.msra.mxu0 %v57
    %79 = vmatpush.msra.mxu0 %v56
    %80 = vmatpush.msra.mxu0 %v55
    %81 = vmatpush.msra.mxu0 %v54
    %82 = vmatpush.msra.mxu0 %v53
    %83 = vmatpush.msra.mxu0 %v52
    %84 = vmatpush.msra.mxu0 %v51
    %85 = vmatpush.msra.mxu0 %v50
    %86 = vmatmul.f32.gmra.mxu0 %v49
    %v87 = vpop.f32.mrf.mxu0
    %v88 = vadd.f32 %v68, %v87
    %89 = vdwg.mxu0
    %s90 = sld [smem:[#allocation2]]
    %vm91 = vcmp.gt.f32.partialorder %v88, 0.0
    %v92 = vstv %s90
    %v93 = vmul.f32 %v92, %v88
    %v94 = vsel %vm91, %v88, %v93
    %95 = vst [vmem:[#allocation8] sm:$0xff] %v94
    // Predicated region
    $region26: #{tpu_custom_call.1} parent=1 // pred_check
      _
    $region27: #{tpu_custom_call.1} parent=1 // pred_check_branch
      %97 = sbr.rel (0) target = $region29
    $region28: #{tpu_custom_call.1} parent=1 // pred_region
      %99 = vsyncadd [#allocation5], 0
      %s101 = sshll.u32 [#allocation8], 4
      %s102 = int_to_ptr.vmem [resolvable:$true] %s101
      %s103 = sshll.u32 %s4, 4
      %s104 = int_to_ptr.hbm [resolvable:$true] %s103
      %106 = dma.vmem_to_hbm [thread:$0]  %s102, 128, %s104, [#allocation5]
    $region29: #{tpu_custom_call.1} parent=1 // pred_fallthru
      _
    // Predicated region
    $region30: #{tpu_custom_call.1} parent=1 // pred_check
      _
    $region31: #{tpu_custom_call.1} parent=1 // pred_check_branch
      %108 = sbr.rel (0) target = $region33
    $region32: #{tpu_custom_call.1} parent=1 // pred_region
      %110 = dma.done [#allocation5], 128
    $region33: #{tpu_custom_call.1} parent=1 // pred_fallthru
      _
    %111 = vsyncpa [#allocation4], 1
    %112 = vsyncpa [#allocation7], 1
    %113 = vsyncpa [#allocation5], 1

</llo_original>
